<compile_context>
chip_gen: v7x
topology: tpu7x:2x2x1
jax: 0.10.0
libtpu: 0.0.40
codegen_flags: <defaults>
</compile_context>

<pallas_src>
import jax
import jax.numpy as jnp
from jax import lax
from jax.experimental import pallas as pl
from jax.experimental.pallas import tpu as pltpu

_LANES = 128
_NEG_PAD = -1e30  # large finite negative (not -inf) to avoid NaNs in max-subtracted softmax


def _round_up(n, m):
    return ((n + m - 1) // m) * m


def _pack_params(params, batch, sentence_length):
    """Fold emb@W1/S into one matrix and pack everything into one lane-dense slab."""
    emb = params["embedding"].astype(jnp.float32)      # (V, D)
    w1 = params["w1"].astype(jnp.float32)              # (D, 128)
    b1 = params["b1"].astype(jnp.float32)              # (1, 128)
    w2 = params["w2"].astype(jnp.float32)              # (128, 64)
    b2 = params["b2"].astype(jnp.float32)              # (1, 64)
    w3 = params["w3"].astype(jnp.float32)              # (64, 4)
    b3 = params["b3"].astype(jnp.float32)              # (1, 4)

    V = emb.shape[0]
    H1 = w1.shape[1]
    H2 = w2.shape[1]
    C = w3.shape[1]
    assert H1 == _LANES, "hidden1 width must equal 128 lanes for this packing"

    S = sentence_length
    B = batch
    BS = B * S
    v_pad = _round_up(V, 8)

    # Algebraic fusion: mean_s emb[ids] @ W1 == (counts/S) @ (emb @ W1) = counts @ M1
    m1 = (emb @ w1) * (1.0 / S)                                           # (V, 128)

    # Constant pooling matrix: pool[b, b*S + s] = 1  (so counts = pool @ onehot(ids))
    pool = (jnp.arange(BS, dtype=jnp.int32) // S ==
            jnp.arange(B, dtype=jnp.int32)[:, None]).astype(jnp.float32)  # (B, BS)

    r_m1 = 0
    r_b1 = r_m1 + v_pad
    r_w2 = r_b1 + 8
    r_b2 = r_w2 + _LANES
    r_w3 = r_b2 + 8
    r_b3 = r_w3 + _LANES
    r_pool = r_b3 + 8
    total = r_pool + _round_up(B, 8)

    slab = jnp.zeros((total, _LANES), jnp.float32)
    slab = slab.at[r_m1:r_m1 + V, :].set(m1)                 # rows >= V stay zero
    slab = slab.at[r_b1, :].set(b1[0])
    slab = slab.at[r_w2:r_w2 + H1, :H2].set(w2)              # cols >= 64 stay zero
    slab = slab.at[r_b2, :H2].set(b2[0])
    slab = slab.at[r_w3:r_w3 + H2, :C].set(w3)               # rows >= 64 / cols >= 4 zero
    slab = slab.at[r_b3, :].set(_NEG_PAD)                    # padded logits -> exp() == 0
    slab = slab.at[r_b3, :C].set(b3[0])
    slab = slab.at[r_pool:r_pool + B, :BS].set(pool)

    layout = dict(v_pad=v_pad, B=B, BS=BS, C=C,
                  r_m1=r_m1, r_b1=r_b1, r_w2=r_w2, r_b2=r_b2,
                  r_w3=r_w3, r_b3=r_b3, r_pool=r_pool)
    return slab, layout


def _make_kernel(layout):
    v_pad = layout["v_pad"]
    B, BS = layout["B"], layout["BS"]
    r_m1, r_b1 = layout["r_m1"], layout["r_b1"]
    r_w2, r_b2 = layout["r_w2"], layout["r_b2"]
    r_w3, r_b3 = layout["r_w3"], layout["r_b3"]
    r_pool = layout["r_pool"]

    def kernel(ids_ref, slab_ref, out_ref):
        # ids_ref : (B*S, 1) int32 token ids (flattened in the wrapper)
        # slab_ref: (rows, 128) f32 packed parameters
        # out_ref : (B, 128) f32 lane-dense softmax (cols >= 4 are exactly 0)

        # one-hot(ids): a single lane-broadcast VPU compare against a vocab iota
        ids = ids_ref[...]                                               # (BS, 1)
        iota_v = lax.broadcasted_iota(jnp.int32, (BS, v_pad), 1)
        onehot = (ids == iota_v).astype(jnp.float32)                     # (BS, v_pad)

        # fused embedding gather + AvgPool1d(S):
        #   counts = pool @ onehot ;  pooled @ W1 = counts @ M1  (M1 = emb@W1/S)
        pool = slab_ref[r_pool:r_pool + B, 0:BS]                         # (B, BS)
        counts = jnp.dot(pool, onehot, preferred_element_type=jnp.float32)  # (B, v_pad)

        m1 = slab_ref[r_m1:r_m1 + v_pad, :]                              # (v_pad, 128)
        b1 = slab_ref[r_b1:r_b1 + 1, :]
        h1 = jnp.tanh(jnp.dot(counts, m1, preferred_element_type=jnp.float32) + b1)
        # dropout(p=0.15): identity at inference

        w2 = slab_ref[r_w2:r_w2 + _LANES, :]                             # cols >= 64 zero
        b2 = slab_ref[r_b2:r_b2 + 1, :]
        h2 = jnp.tanh(jnp.dot(h1, w2, preferred_element_type=jnp.float32) + b2)
        # dropout(p=0.15): identity at inference

        w3 = slab_ref[r_w3:r_w3 + _LANES, :]                             # rows>=64, cols>=4 zero
        b3 = slab_ref[r_b3:r_b3 + 1, :]                                  # cols >= 4 == -1e30
        logits = jnp.dot(h2, w3, preferred_element_type=jnp.float32) + b3

        # softmax over 128 lanes; padded lanes exp() to 0, so cols 0..3 match a
        # 4-wide softmax exactly.  Exact divide -> rows sum to 1 in f32.
        m = jnp.max(logits, axis=-1, keepdims=True)
        e = jnp.exp(logits - m)
        out_ref[...] = e / jnp.sum(e, axis=-1, keepdims=True)

    return kernel


def torch_model_forward(token_ids, params):
    """token_ids: (B, S) int token ids; returns softmax probabilities (B, 4) float32."""
    B, S = token_ids.shape
    slab, layout = _pack_params(params, B, S)
    kernel = _make_kernel(layout)

    ids_flat = token_ids.reshape(B * S, 1).astype(jnp.int32)

    vmem = pl.BlockSpec(memory_space=pltpu.MemorySpace.VMEM)
    # Whole-problem-in-VMEM, grid-less: at these sizes the kernel is pure launch
    # overhead.  If B / vocab / hidden grow, add a batch grid with blocks of >=128
    # rows and dimension_semantics=("parallel",) (2 TCs on v7x) and size tiles for
    # v7x's 64 MiB VMEM rather than v6e's 128 MiB.
    probs_padded = pl.pallas_call(
        kernel,
        out_shape=jax.ShapeDtypeStruct((B, _LANES), jnp.float32),
        in_specs=[vmem, vmem],
        out_specs=vmem,
    )(ids_flat, slab)
    return probs_padded[:, :layout["C"]]                                  # (B, 4)


def _reference_forward(token_ids, params):
    """Pure-JAX reference matching the PyTorch forward (inference path)."""
    x = jnp.take(params["embedding"], token_ids, axis=0)                  # (B, S, D)
    pooled = jnp.mean(x, axis=1)                                          # AvgPool1d(S) + squeeze
    h1 = jnp.tanh(pooled @ params["w1"] + params["b1"])
    h2 = jnp.tanh(h1 @ params["w2"] + params["b2"])
    logits = h2 @ params["w3"] + params["b3"]
    return jax.nn.softmax(logits, axis=-1)


def init_params(key, vocab_size, vocab_dim):
    ks = jax.random.split(key, 7)
    return {
        "embedding": jax.random.normal(ks[0], (vocab_size, vocab_dim), jnp.float32) * 0.1,
        "w1": jax.random.normal(ks[1], (vocab_dim, 128), jnp.float32) * 0.1,
        "b1": jax.random.normal(ks[2], (1, 128), jnp.float32) * 0.01,
        "w2": jax.random.normal(ks[3], (128, 64), jnp.float32) * 0.1,
        "b2": jax.random.normal(ks[4], (1, 64), jnp.float32) * 0.01,
        "w3": jax.random.normal(ks[5], (64, 4), jnp.float32) * 0.1,
        "b3": jax.random.normal(ks[6], (1, 4), jnp.float32) * 0.01,
    }


if __name__ == "__main__":
    key = jax.random.PRNGKey(0)

    VOCAB_SIZE = 30        # len(vocab)
    VOCAB_DIM = 32         # vocab_dim
    SENTENCE_LENGTH = 8    # sentence_length
    BATCH = 8

    pkey, dkey = jax.random.split(key)
    params = init_params(pkey, VOCAB_SIZE, VOCAB_DIM)

    token_ids = jax.random.randint(
        dkey, (BATCH, SENTENCE_LENGTH), minval=0, maxval=VOCAB_SIZE, dtype=jnp.int32
    )

    probs = torch_model_forward(token_ids, params)
    probs = jax.block_until_ready(probs)

    # sanity: shape, probabilities sum to 1 (exact divide), and match the reference
    assert probs.shape == (BATCH, 4)
    row_sums = jnp.sum(probs, axis=-1)
    assert bool(jnp.all(jnp.abs(row_sums - 1.0) < 1e-4))

    ref = _reference_forward(token_ids, params)
    assert bool(jnp.all(jnp.abs(probs - ref) < 1e-3))

    print("KERNEL_OK")
</pallas_src>

<mosaic_0001>
module attributes {stable_mosaic.version = 11 : i64} {
  func.func @kernel(%arg0: memref<64x1xi32, #tpu.memory_space<vmem>>, %arg1: memref<320x128xf32, #tpu.memory_space<vmem>>, %arg2: memref<8x128xf32, #tpu.memory_space<vmem>>) attributes {dimension_semantics = [], scalar_prefetch = 0 : i64, scratch_operands = 0 : i64, tpu.core_type = #tpu.core_type<tc>} {
    %c0 = arith.constant 0 : index
    %c0_0 = arith.constant 0 : index
    %0 = vector.load %arg0[%c0, %c0_0] : memref<64x1xi32, #tpu.memory_space<vmem>>, vector<64x1xi32>
    %1 = tpu.iota {dimensions = array<i32: 1>} : vector<64x32xi32>
    %2 = vector.broadcast %0 : vector<64x1xi32> to vector<64x32xi32>
    %3 = arith.cmpi eq, %2, %1 : vector<64x32xi32>
    %4 = arith.extui %3 : vector<64x32xi1> to vector<64x32xi32>
    %5 = arith.sitofp %4 : vector<64x32xi32> to vector<64x32xf32>
    %c312 = arith.constant 312 : index
    %c0_1 = arith.constant 0 : index
    %6 = vector.load %arg1[%c312, %c0_1] : memref<320x128xf32, #tpu.memory_space<vmem>>, vector<8x64xf32>
    %cst = arith.constant dense<0.000000e+00> : vector<8x32xf32>
    %7 = tpu.matmul %6, %5, %cst {dimension_numbers = #tpu.dot_dimension_numbers<[1], [0], [0], [1], [0, 0, 1, 1], [], []>} : vector<8x64xf32>, vector<64x32xf32>, vector<8x32xf32> -> vector<8x32xf32>
    %c0_2 = arith.constant 0 : index
    %c0_3 = arith.constant 0 : index
    %8 = vector.load %arg1[%c0_2, %c0_3] : memref<320x128xf32, #tpu.memory_space<vmem>>, vector<32x128xf32>
    %c32 = arith.constant 32 : index
    %c0_4 = arith.constant 0 : index
    %9 = vector.load %arg1[%c32, %c0_4] : memref<320x128xf32, #tpu.memory_space<vmem>>, vector<1x128xf32>
    %cst_5 = arith.constant dense<0.000000e+00> : vector<8x128xf32>
    %10 = tpu.matmul %7, %8, %cst_5 {dimension_numbers = #tpu.dot_dimension_numbers<[1], [0], [0], [1], [0, 0, 1, 1], [], []>} : vector<8x32xf32>, vector<32x128xf32>, vector<8x128xf32> -> vector<8x128xf32>
    %11 = vector.broadcast %9 : vector<1x128xf32> to vector<8x128xf32>
    %12 = arith.addf %10, %11 : vector<8x128xf32>
    %13 = math.tanh %12 : vector<8x128xf32>
    %c40 = arith.constant 40 : index
    %c0_6 = arith.constant 0 : index
    %14 = vector.load %arg1[%c40, %c0_6] : memref<320x128xf32, #tpu.memory_space<vmem>>, vector<128x128xf32>
    %c168 = arith.constant 168 : index
    %c0_7 = arith.constant 0 : index
    %15 = vector.load %arg1[%c168, %c0_7] : memref<320x128xf32, #tpu.memory_space<vmem>>, vector<1x128xf32>
    %cst_8 = arith.constant dense<0.000000e+00> : vector<8x128xf32>
    %16 = tpu.matmul %13, %14, %cst_8 {dimension_numbers = #tpu.dot_dimension_numbers<[1], [0], [0], [1], [0, 0, 1, 1], [], []>} : vector<8x128xf32>, vector<128x128xf32>, vector<8x128xf32> -> vector<8x128xf32>
    %17 = vector.broadcast %15 : vector<1x128xf32> to vector<8x128xf32>
    %18 = arith.addf %16, %17 : vector<8x128xf32>
    %19 = math.tanh %18 : vector<8x128xf32>
    %c176 = arith.constant 176 : index
    %c0_9 = arith.constant 0 : index
    %20 = vector.load %arg1[%c176, %c0_9] : memref<320x128xf32, #tpu.memory_space<vmem>>, vector<128x128xf32>
    %c304 = arith.constant 304 : index
    %c0_10 = arith.constant 0 : index
    %21 = vector.load %arg1[%c304, %c0_10] : memref<320x128xf32, #tpu.memory_space<vmem>>, vector<1x128xf32>
    %cst_11 = arith.constant dense<0.000000e+00> : vector<8x128xf32>
    %22 = tpu.matmul %19, %20, %cst_11 {dimension_numbers = #tpu.dot_dimension_numbers<[1], [0], [0], [1], [0, 0, 1, 1], [], []>} : vector<8x128xf32>, vector<128x128xf32>, vector<8x128xf32> -> vector<8x128xf32>
    %23 = vector.broadcast %21 : vector<1x128xf32> to vector<8x128xf32>
    %24 = arith.addf %22, %23 : vector<8x128xf32>
    %cst_12 = arith.constant dense<0xFF800000> : vector<8xf32>
    %25 = vector.multi_reduction <maximumf>, %24, %cst_12 [1] : vector<8x128xf32> to vector<8xf32>
    %26 = vector.shape_cast %25 : vector<8xf32> to vector<8x1xf32>
    %27 = vector.broadcast %26 : vector<8x1xf32> to vector<8x128xf32>
    %28 = arith.subf %24, %27 : vector<8x128xf32>
    %29 = math.exp %28 : vector<8x128xf32>
    %cst_13 = arith.constant dense<0.000000e+00> : vector<8xf32>
    %30 = vector.multi_reduction <add>, %29, %cst_13 [1] : vector<8x128xf32> to vector<8xf32>
    %31 = vector.shape_cast %30 : vector<8xf32> to vector<8x1xf32>
    %32 = vector.broadcast %31 : vector<8x1xf32> to vector<8x128xf32>
    %33 = arith.divf %29, %32 : vector<8x128xf32>
    %c0_14 = arith.constant 0 : index
    %c0_15 = arith.constant 0 : index
    %34 = vector.load %arg2[%c0_14, %c0_15] : memref<8x128xf32, #tpu.memory_space<vmem>>, vector<8x128xf32>
    tpu.vector_store %arg2[%c0_14, %c0_15], %33 {strides = array<i32>} : memref<8x128xf32, #tpu.memory_space<vmem>>, vector<8x128xf32>,
    return
  }
}

</mosaic_0001>

<llo_original>
// kernel: tpu_custom_call.1
$region0: #{tpu_custom_call.1}
  #allocation0 [shape = 'u32[]', space=smem, size = 0x4, offset = 0x4, fixed_abs, tag = 'smem constant byte address 0x4 - core index']
  #allocation1 [shape = 'u32[144,128]{1,0:T(1,128)}', space=vmem, size = 0x12000, scoped, tag = 'internal scratch']
  %s0 = inlined_call_operand.vmem [shape: s32[64,1], index: 0, kind: input, shape index: {}]
  %s1 = inlined_call_operand.hbm [shape: f32[320,128], index: 1, kind: input, shape index: {}]
  %s2 = inlined_call_operand.hbm [shape: f32[8,128], index: 2, kind: output, shape index: {}]
  %s3 = sld [smem:[#allocation0]]
  $region22: #{tpu_custom_call.1} parent=0
    _
  %s5 = ssub.s32 1, %s3
  %s6 = scalar_select 0, %s5, %s3
  $region1: #{tpu_custom_call.1} parent=0
    #allocation2 [shape = 'u8[163840]{0}', space=vmem, size = 0x28000, scoped, tag = 'input window, operand 1, single buffered']
    #allocation3 [shape = 's32[1]{0}', space=sflag, size = 0x4, scoped, tag = 'scoped memory for tpu_custom_call.1']
    #allocation4 [shape = 's32[1]{0}', space=sflag, size = 0x4, scoped, tag = 'scoped memory for tpu_custom_call.1']
    #allocation5 [shape = 'u8[4096]{0}', space=vmem, size = 0x1000, scoped, tag = 'output window, operand 0, single buffered']
    %7 = vsyncpa [#allocation3], 0
    %8 = vsyncpa [#allocation4], 0
    // Predicated region
    $region2: #{tpu_custom_call.1} parent=1 // pred_check
      _
    $region3: #{tpu_custom_call.1} parent=1 // pred_check_branch
      %10 = sbr.rel (0) target = $region5
    $region4: #{tpu_custom_call.1} parent=1 // pred_region
      _
    $region5: #{tpu_custom_call.1} parent=1 // pred_fallthru
      _
    // Predicated region
    $region6: #{tpu_custom_call.1} parent=1 // pred_check
      _
    $region7: #{tpu_custom_call.1} parent=1 // pred_check_branch
      %12 = sbr.rel (0) target = $region9
    $region8: #{tpu_custom_call.1} parent=1 // pred_region
      %s14 = ssub.s32 5120, 5120
      %15 = vsyncadd [#allocation3], %s14
      %s16 = sshll.u32 [#allocation2], 4
      %s17 = int_to_ptr.vmem [resolvable:$true] %s16
      %22 = dma.hbm_to_vmem [thread:$0]  %s1, 5120, %s17, [#allocation3], 128, 128, 8
    $region9: #{tpu_custom_call.1} parent=1 // pred_fallthru
      _
    // Predicated region
    $region10: #{tpu_custom_call.1} parent=1 // pred_check
      _
    $region11: #{tpu_custom_call.1} parent=1 // pred_check_branch
      %24 = sbr.rel (0) target = $region13
    $region12: #{tpu_custom_call.1} parent=1 // pred_region
      %25 = dma.done [#allocation3], 5120
    $region13: #{tpu_custom_call.1} parent=1 // pred_fallthru
      _
    %v26 = vld [vmem:[%s0] sm:$0xff]
    %v27 = vld [vmem:[%s0 + $0x8] sm:$0xff]
    %v28 = vld [vmem:[%s0 + $0x10] sm:$0xff]
    %v29 = vld [vmem:[%s0 + $0x18] sm:$0xff]
    %v30 = vld [vmem:[%s0 + $0x20] sm:$0xff]
    %v31 = vld [vmem:[%s0 + $0x28] sm:$0xff]
    %v32 = vld [vmem:[%s0 + $0x30] sm:$0xff]
    %v33 = vld [vmem:[%s0 + $0x38] sm:$0xff]
    %v34 = vlaneseq
    %v35 = vand.u32 %v34, 127
    %36 = vset.pattern.permute.xlu0 0
    %37 = vperm.xlu0 %36, %v26
    %v38 = vpop.permute.xlu0 %37
    %39 = vset.pattern.permute.xlu0 0
    %40 = vperm.xlu0 %39, %v27
    %v41 = vpop.permute.xlu0 %40
    %42 = vset.pattern.permute.xlu0 0
    %43 = vperm.xlu0 %42, %v28
    %v44 = vpop.permute.xlu0 %43
    %45 = vset.pattern.permute.xlu0 0
    %46 = vperm.xlu0 %45, %v29
    %v47 = vpop.permute.xlu0 %46
    %48 = vset.pattern.permute.xlu0 0
    %49 = vperm.xlu0 %48, %v30
    %v50 = vpop.permute.xlu0 %49
    %51 = vset.pattern.permute.xlu0 0
    %52 = vperm.xlu0 %51, %v31
    %v53 = vpop.permute.xlu0 %52
    %54 = vset.pattern.permute.xlu0 0
    %55 = vperm.xlu0 %54, %v32
    %v56 = vpop.permute.xlu0 %55
    %57 = vset.pattern.permute.xlu0 0
    %58 = vperm.xlu0 %57, %v33
    %v59 = vpop.permute.xlu0 %58
    %vm60 = vcmp.eq.s32.totalorder %v38, %v35
    %vm61 = vcmp.eq.s32.totalorder %v41, %v35
    %vm62 = vcmp.eq.s32.totalorder %v44, %v35
    %vm63 = vcmp.eq.s32.totalorder %v47, %v35
    %vm64 = vcmp.eq.s32.totalorder %v50, %v35
    %vm65 = vcmp.eq.s32.totalorder %v53, %v35
    %vm66 = vcmp.eq.s32.totalorder %v56, %v35
    %vm67 = vcmp.eq.s32.totalorder %v59, %v35
    %v68 = vsel %vm60, 1, 0
    %v69 = vsel %vm61, 1, 0
    %v70 = vsel %vm62, 1, 0
    %v71 = vsel %vm63, 1, 0
    %v72 = vsel %vm64, 1, 0
    %v73 = vsel %vm65, 1, 0
    %v74 = vsel %vm66, 1, 0
    %v75 = vsel %vm67, 1, 0
    %v76 = vcvt.s32.f32 %v68
    %v77 = vcvt.s32.f32 %v69
    %v78 = vcvt.s32.f32 %v70
    %v79 = vcvt.s32.f32 %v71
    %v80 = vcvt.s32.f32 %v72
    %v81 = vcvt.s32.f32 %v73
    %v82 = vcvt.s32.f32 %v74
    %v83 = vcvt.s32.f32 %v75
    %v84 = vld [vmem:[#allocation2 + $0x138] sm:$0xff]
    %vm85 = vcmask 523264
    %v87 = vsel %vm85, %v84, 0
    %89 = vmatprep.subr.mxu0 0.0
    %90 = vmatpush1.msra.mxu0 %v76
    %91 = vmatprep.subr.mxu0 0.0
    %92 = vmatpush1.msra.mxu0 %v77
    %93 = vmatprep.subr.mxu0 0.0
    %94 = vmatpush1.msra.mxu0 %v78
    %95 = vmatprep.subr.mxu0 0.0
    %96 = vmatpush1.msra.mxu0 %v79
    %97 = vmatprep.subr.mxu0 0.0
    %98 = vmatpush1.msra.mxu0 %v80
    %99 = vmatprep.subr.mxu0 0.0
    %100 = vmatpush1.msra.mxu0 %v81
    %101 = vmatprep.subr.mxu0 0.0
    %102 = vmatpush1.msra.mxu0 %v82
    %103 = vmatprep.subr.mxu0 0.0
    %104 = vmatpush1.msra.mxu0 %v83
    %105 = vmatprep.subr.mxu0 0.0
    %106 = vmatpush1.msra.mxu0 0.0
    %107 = vmatprep.subr.mxu0 0.0
    %108 = vmatpush1.msra.mxu0 0.0
    %109 = vmatprep.subr.mxu0 0.0
    %110 = vmatpush1.msra.mxu0 0.0
    %111 = vmatprep.subr.mxu0 0.0
    %112 = vmatpush1.msra.mxu0 0.0
    %113 = vmatprep.subr.mxu0 0.0
    %114 = vmatpush1.msra.mxu0 0.0
    %115 = vmatprep.subr.mxu0 0.0
    %116 = vmatpush1.msra.mxu0 0.0
    %117 = vmatprep.subr.mxu0 0.0
    %118 = vmatpush1.msra.mxu0 0.0
    %119 = vmatprep.subr.mxu0 0.0
    %120 = vmatpush1.msra.mxu0 0.0
    %121 = vmatprep.subr.mxu0 0.0
    %122 = vmatpush1.msra.mxu0 0.0
    %123 = vmatprep.subr.mxu0 0.0
    %124 = vmatpush1.msra.mxu0 0.0
    %125 = vmatprep.subr.mxu0 0.0
    %126 = vmatpush1.msra.mxu0 0.0
    %127 = vmatprep.subr.mxu0 0.0
    %128 = vmatpush1.msra.mxu0 0.0
    %129 = vmatprep.subr.mxu0 0.0
    %130 = vmatpush1.msra.mxu0 0.0
    %131 = vmatprep.subr.mxu0 0.0
    %132 = vmatpush1.msra.mxu0 0.0
    %133 = vmatprep.subr.mxu0 0.0
    %134 = vmatpush1.msra.mxu0 0.0
    %135 = vmatprep.subr.mxu0 0.0
    %136 = vmatpush1.msra.mxu0 0.0
    %137 = vmatprep.subr.mxu0 0.0
    %138 = vmatpush1.msra.mxu0 0.0
    %139 = vmatprep.subr.mxu0 0.0
    %140 = vmatpush1.msra.mxu0 0.0
    %141 = vmatprep.subr.mxu0 0.0
    %142 = vmatpush1.msra.mxu0 0.0
    %143 = vmatprep.subr.mxu0 0.0
    %144 = vmatpush1.msra.mxu0 0.0
    %145 = vmatprep.subr.mxu0 0.0
    %146 = vmatpush1.msra.mxu0 0.0
    %147 = vmatprep.subr.mxu0 0.0
    %148 = vmatpush1.msra.mxu0 0.0
    %149 = vmatprep.subr.mxu0 0.0
    %150 = vmatpush1.msra.mxu0 0.0
    %151 = vmatprep.subr.mxu0 0.0
    %152 = vmatpush1.msra.mxu0 0.0
    %153 = vmatprep.mubr.f32.mxu0 0.0
    %154 = vmatmul.mubr.f32.gmra.mrb[0].mxu0 %v87
    %v155 = vpop.f32.mrb[0].mxu0
    %v156 = vadd.f32 0.0, %v155
    %v157 = vpop.f32.mrb[0].mxu0
    %158 = vdwg.mxu0
    %v159 = vld [vmem:[#allocation2] sm:$0xff]
    %v160 = vld [vmem:[#allocation2 + $0x8] sm:$0xff]
    %v161 = vld [vmem:[#allocation2 + $0x10] sm:$0xff]
    %v162 = vld [vmem:[#allocation2 + $0x18] sm:$0xff]
    %v163 = vld [vmem:[#allocation2 + $0x20] sm:$0x1]
    %v164 = vlaneseq
    %v165 = vshrl.u32 %v164, 7
    %v166 = vsub.s32 0, %v165
    %v167 = vrot.slane %v163, %v166
    %vm168 = vcmask 261120
    %v170 = vsel %vm168, %v156, 0
    %172 = vmatprep.subr.mxu0 0.0
    %173 = vmatpush1.msra.mxu0 %v159
    %174 = vmatprep.subr.mxu0 0.0
    %175 = vmatpush1.msra.mxu0 %v160
    %176 = vmatprep.subr.mxu0 0.0
    %177 = vmatpush1.msra.mxu0 %v161
    %178 = vmatprep.subr.mxu0 0.0
    %179 = vmatpush1.msra.mxu0 %v162
    %180 = vmatprep.subr.mxu0 0.0
    %181 = vmatpush1.msra.mxu0 0.0
    %182 = vmatprep.subr.mxu0 0.0
    %183 = vmatpush1.msra.mxu0 0.0
    %184 = vmatprep.subr.mxu0 0.0
    %185 = vmatpush1.msra.mxu0 0.0
    %186 = vmatprep.subr.mxu0 0.0
    %187 = vmatpush1.msra.mxu0 0.0
    %188 = vmatprep.subr.mxu0 0.0
    %189 = vmatpush1.msra.mxu0 0.0
    %190 = vmatprep.subr.mxu0 0.0
    %191 = vmatpush1.msra.mxu0 0.0
    %192 = vmatprep.subr.mxu0 0.0
    %193 = vmatpush1.msra.mxu0 0.0
    %194 = vmatprep.subr.mxu0 0.0
    %195 = vmatpush1.msra.mxu0 0.0
    %196 = vmatprep.subr.mxu0 0.0
    %197 = vmatpush1.msra.mxu0 0.0
    %198 = vmatprep.subr.mxu0 0.0
    %199 = vmatpush1.msra.mxu0 0.0
    %200 = vmatprep.subr.mxu0 0.0
    %201 = vmatpush1.msra.mxu0 0.0
    %202 = vmatprep.subr.mxu0 0.0
    %203 = vmatpush1.msra.mxu0 0.0
    %204 = vmatprep.subr.mxu0 0.0
    %205 = vmatpush1.msra.mxu0 0.0
    %206 = vmatprep.subr.mxu0 0.0
    %207 = vmatpush1.msra.mxu0 0.0
    %208 = vmatprep.subr.mxu0 0.0
    %209 = vmatpush1.msra.mxu0 0.0
    %210 = vmatprep.subr.mxu0 0.0
    %211 = vmatpush1.msra.mxu0 0.0
    %212 = vmatprep.subr.mxu0 0.0
    %213 = vmatpush1.msra.mxu0 0.0
    %214 = vmatprep.subr.mxu0 0.0
    %215 = vmatpush1.msra.mxu0 0.0
    %216 = vmatprep.subr.mxu0 0.0
    %217 = vmatpush1.msra.mxu0 0.0
    %218 = vmatprep.subr.mxu0 0.0
    %219 = vmatpush1.msra.mxu0 0.0
    %220 = vmatprep.subr.mxu0 0.0
    %221 = vmatpush1.msra.mxu0 0.0
    %222 = vmatprep.subr.mxu0 0.0
    %223 = vmatpush1.msra.mxu0 0.0
    %224 = vmatprep.subr.mxu0 0.0
    %225 = vmatpush1.msra.mxu0 0.0
    %226 = vmatprep.subr.mxu0 0.0
    %227 = vmatpush1.msra.mxu0 0.0
    %228 = vmatprep.subr.mxu0 0.0
    %229 = vmatpush1.msra.mxu0 0.0
    %230 = vmatprep.subr.mxu0 0.0
    %231 = vmatpush1.msra.mxu0 0.0
    %232 = vmatprep.subr.mxu0 0.0
    %233 = vmatpush1.msra.mxu0 0.0
    %234 = vmatprep.subr.mxu0 0.0
    %235 = vmatpush1.msra.mxu0 0.0
    %236 = vmatprep.mubr.f32.mxu0 0.0
    %237 = vmatmul.mubr.f32.gmra.mrb[0].mxu0 %v170
    %v238 = vpop.f32.mrb[0].mxu0
    %v239 = vadd.f32 %v167, %v238
    %v240 = vpop.f32.mrb[0].mxu0
    %241 = vdwg.mxu0
    %v242 = vtanh.pop %v239
    %v243 = vld [vmem:[#allocation2 + $0x28] sm:$0xff]
    %v244 = vld [vmem:[#allocation2 + $0x30] sm:$0xff]
    %v245 = vld [vmem:[#allocation2 + $0x38] sm:$0xff]
    %v246 = vld [vmem:[#allocation2 + $0x40] sm:$0xff]
    %v247 = vld [vmem:[#allocation2 + $0x48] sm:$0xff]
    %v248 = vld [vmem:[#allocation2 + $0x50] sm:$0xff]
    %v249 = vld [vmem:[#allocation2 + $0x58] sm:$0xff]
    %v250 = vld [vmem:[#allocation2 + $0x60] sm:$0xff]
    %v251 = vld [vmem:[#allocation2 + $0x68] sm:$0xff]
    %v252 = vld [vmem:[#allocation2 + $0x70] sm:$0xff]
    %v253 = vld [vmem:[#allocation2 + $0x78] sm:$0xff]
    %v254 = vld [vmem:[#allocation2 + $0x80] sm:$0xff]
    %v255 = vld [vmem:[#allocation2 + $0x88] sm:$0xff]
    %v256 = vld [vmem:[#allocation2 + $0x90] sm:$0xff]
    %v257 = vld [vmem:[#allocation2 + $0x98] sm:$0xff]
    %v258 = vld [vmem:[#allocation2 + $0xa0] sm:$0xff]
    %v259 = vld [vmem:[#allocation2 + $0xa8] sm:$0x1]
    %v260 = vlaneseq
    %v261 = vshrl.u32 %v260, 7
    %v262 = vsub.s32 0, %v261
    %v263 = vrot.slane %v259, %v262
    %264 = vmatprep.subr.mxu0 0.0
    %265 = vmatpush1.msra.mxu0 %v243
    %266 = vmatprep.subr.mxu0 0.0
    %267 = vmatpush1.msra.mxu0 %v244
    %268 = vmatprep.subr.mxu0 0.0
    %269 = vmatpush1.msra.mxu0 %v245
    %270 = vmatprep.subr.mxu0 0.0
    %271 = vmatpush1.msra.mxu0 %v246
    %272 = vmatprep.subr.mxu0 0.0
    %273 = vmatpush1.msra.mxu0 %v247
    %274 = vmatprep.subr.mxu0 0.0
    %275 = vmatpush1.msra.mxu0 %v248
    %276 = vmatprep.subr.mxu0 0.0
    %277 = vmatpush1.msra.mxu0 %v249
    %278 = vmatprep.subr.mxu0 0.0
    %279 = vmatpush1.msra.mxu0 %v250
    %280 = vmatprep.subr.mxu0 0.0
    %281 = vmatpush1.msra.mxu0 %v251
    %282 = vmatprep.subr.mxu0 0.0
    %283 = vmatpush1.msra.mxu0 %v252
    %284 = vmatprep.subr.mxu0 0.0
    %285 = vmatpush1.msra.mxu0 %v253
    %286 = vmatprep.subr.mxu0 0.0
    %287 = vmatpush1.msra.mxu0 %v254
    %288 = vmatprep.subr.mxu0 0.0
    %289 = vmatpush1.msra.mxu0 %v255
    %290 = vmatprep.subr.mxu0 0.0
    %291 = vmatpush1.msra.mxu0 %v256
    %292 = vmatprep.subr.mxu0 0.0
    %293 = vmatpush1.msra.mxu0 %v257
    %294 = vmatprep.subr.mxu0 0.0
    %295 = vmatpush1.msra.mxu0 %v258
    %296 = vmatprep.subr.mxu0 0.0
    %297 = vmatpush1.msra.mxu0 0.0
    %298 = vmatprep.subr.mxu0 0.0
    %299 = vmatpush1.msra.mxu0 0.0
    %300 = vmatprep.subr.mxu0 0.0
    %301 = vmatpush1.msra.mxu0 0.0
    %302 = vmatprep.subr.mxu0 0.0
    %303 = vmatpush1.msra.mxu0 0.0
    %304 = vmatprep.subr.mxu0 0.0
    %305 = vmatpush1.msra.mxu0 0.0
    %306 = vmatprep.subr.mxu0 0.0
    %307 = vmatpush1.msra.mxu0 0.0
    %308 = vmatprep.subr.mxu0 0.0
    %309 = vmatpush1.msra.mxu0 0.0
    %310 = vmatprep.subr.mxu0 0.0
    %311 = vmatpush1.msra.mxu0 0.0
    %312 = vmatprep.subr.mxu0 0.0
    %313 = vmatpush1.msra.mxu0 0.0
    %314 = vmatprep.subr.mxu0 0.0
    %315 = vmatpush1.msra.mxu0 0.0
    %316 = vmatprep.subr.mxu0 0.0
    %317 = vmatpush1.msra.mxu0 0.0
    %318 = vmatprep.subr.mxu0 0.0
    %319 = vmatpush1.msra.mxu0 0.0
    %320 = vmatprep.subr.mxu0 0.0
    %321 = vmatpush1.msra.mxu0 0.0
    %322 = vmatprep.subr.mxu0 0.0
    %323 = vmatpush1.msra.mxu0 0.0
    %324 = vmatprep.subr.mxu0 0.0
    %325 = vmatpush1.msra.mxu0 0.0
    %326 = vmatprep.subr.mxu0 0.0
    %327 = vmatpush1.msra.mxu0 0.0
    %328 = vmatprep.mubr.f32.mxu0 0.0
    %329 = vmatmul.mubr.f32.gmra.mrb[0].mxu0 %v242
    %v330 = vpop.f32.mrb[0].mxu0
    %v331 = vadd.f32 %v263, %v330
    %v332 = vpop.f32.mrb[0].mxu0
    %333 = vdwg.mxu0
    %v334 = vtanh.pop %v331
    %v335 = vld [vmem:[#allocation2 + $0xb0] sm:$0xff]
    %v336 = vld [vmem:[#allocation2 + $0xb8] sm:$0xff]
    %v337 = vld [vmem:[#allocation2 + $0xc0] sm:$0xff]
    %v338 = vld [vmem:[#allocation2 + $0xc8] sm:$0xff]
    %v339 = vld [vmem:[#allocation2 + $0xd0] sm:$0xff]
    %v340 = vld [vmem:[#allocation2 + $0xd8] sm:$0xff]
    %v341 = vld [vmem:[#allocation2 + $0xe0] sm:$0xff]
    %v342 = vld [vmem:[#allocation2 + $0xe8] sm:$0xff]
    %v343 = vld [vmem:[#allocation2 + $0xf0] sm:$0xff]
    %v344 = vld [vmem:[#allocation2 + $0xf8] sm:$0xff]
    %v345 = vld [vmem:[#allocation2 + $0x100] sm:$0xff]
    %v346 = vld [vmem:[#allocation2 + $0x108] sm:$0xff]
    %v347 = vld [vmem:[#allocation2 + $0x110] sm:$0xff]
    %v348 = vld [vmem:[#allocation2 + $0x118] sm:$0xff]
    %v349 = vld [vmem:[#allocation2 + $0x120] sm:$0xff]
    %v350 = vld [vmem:[#allocation2 + $0x128] sm:$0xff]
    %v351 = vld [vmem:[#allocation2 + $0x130] sm:$0x1]
    %v352 = vlaneseq
    %v353 = vshrl.u32 %v352, 7
    %v354 = vsub.s32 0, %v353
    %v355 = vrot.slane %v351, %v354
    %356 = vmatprep.subr.mxu0 0.0
    %357 = vmatpush1.msra.mxu0 %v335
    %358 = vmatprep.subr.mxu0 0.0
    %359 = vmatpush1.msra.mxu0 %v336
    %360 = vmatprep.subr.mxu0 0.0
    %361 = vmatpush1.msra.mxu0 %v337
    %362 = vmatprep.subr.mxu0 0.0
    %363 = vmatpush1.msra.mxu0 %v338
    %364 = vmatprep.subr.mxu0 0.0
    %365 = vmatpush1.msra.mxu0 %v339
    %366 = vmatprep.subr.mxu0 0.0
    %367 = vmatpush1.msra.mxu0 %v340
    %368 = vmatprep.subr.mxu0 0.0
    %369 = vmatpush1.msra.mxu0 %v341
    %370 = vmatprep.subr.mxu0 0.0
    %371 = vmatpush1.msra.mxu0 %v342
    %372 = vmatprep.subr.mxu0 0.0
    %373 = vmatpush1.msra.mxu0 %v343
    %374 = vmatprep.subr.mxu0 0.0
    %375 = vmatpush1.msra.mxu0 %v344
    %376 = vmatprep.subr.mxu0 0.0
    %377 = vmatpush1.msra.mxu0 %v345
    %378 = vmatprep.subr.mxu0 0.0
    %379 = vmatpush1.msra.mxu0 %v346
    %380 = vmatprep.subr.mxu0 0.0
    %381 = vmatpush1.msra.mxu0 %v347
    %382 = vmatprep.subr.mxu0 0.0
    %383 = vmatpush1.msra.mxu0 %v348
    %384 = vmatprep.subr.mxu0 0.0
    %385 = vmatpush1.msra.mxu0 %v349
    %386 = vmatprep.subr.mxu0 0.0
    %387 = vmatpush1.msra.mxu0 %v350
    %388 = vmatprep.subr.mxu0 0.0
    %389 = vmatpush1.msra.mxu0 0.0
    %390 = vmatprep.subr.mxu0 0.0
    %391 = vmatpush1.msra.mxu0 0.0
    %392 = vmatprep.subr.mxu0 0.0
    %393 = vmatpush1.msra.mxu0 0.0
    %394 = vmatprep.subr.mxu0 0.0
    %395 = vmatpush1.msra.mxu0 0.0
    %396 = vmatprep.subr.mxu0 0.0
    %397 = vmatpush1.msra.mxu0 0.0
    %398 = vmatprep.subr.mxu0 0.0
    %399 = vmatpush1.msra.mxu0 0.0
    %400 = vmatprep.subr.mxu0 0.0
    %401 = vmatpush1.msra.mxu0 0.0
    %402 = vmatprep.subr.mxu0 0.0
    %403 = vmatpush1.msra.mxu0 0.0
    %404 = vmatprep.subr.mxu0 0.0
    %405 = vmatpush1.msra.mxu0 0.0
    %406 = vmatprep.subr.mxu0 0.0
    %407 = vmatpush1.msra.mxu0 0.0
    %408 = vmatprep.subr.mxu0 0.0
    %409 = vmatpush1.msra.mxu0 0.0
    %410 = vmatprep.subr.mxu0 0.0
    %411 = vmatpush1.msra.mxu0 0.0
    %412 = vmatprep.subr.mxu0 0.0
    %413 = vmatpush1.msra.mxu0 0.0
    %414 = vmatprep.subr.mxu0 0.0
    %415 = vmatpush1.msra.mxu0 0.0
    %416 = vmatprep.subr.mxu0 0.0
    %417 = vmatpush1.msra.mxu0 0.0
    %418 = vmatprep.subr.mxu0 0.0
    %419 = vmatpush1.msra.mxu0 0.0
    %420 = vmatprep.mubr.f32.mxu0 0.0
    %421 = vmatmul.mubr.f32.gmra.mrb[0].mxu0 %v334
    %v422 = vpop.f32.mrb[0].mxu0
    %v423 = vadd.f32 %v355, %v422
    %v424 = vpop.f32.mrb[0].mxu0
    %425 = vdwg.mxu0
    %426 = vmax.xlane.f32.xlu0 %v423
    %v427 = vpop.xlane.xlu0 %426
    %v428 = vsub.f32 %v423, %v427
    %v429 = vmul.f32 %v428, 1.442695
    %v430 = vpow.pop %v429
    %431 = vadd.xlane.f32.xlu0 %v430
    %v432 = vpop.xlane.xlu0 %431
    %v433 = vrcp.pop %v432
    %v434 = vmul.f32 %v430, %v433
    %435 = vst [vmem:[#allocation5] sm:$0xff] %v434
    // Predicated region
    $region14: #{tpu_custom_call.1} parent=1 // pred_check
      _
    $region15: #{tpu_custom_call.1} parent=1 // pred_check_branch
      %437 = sbr.rel (0) target = $region17
    $region16: #{tpu_custom_call.1} parent=1 // pred_region
      %s439 = ssub.s32 128, 128
      %440 = vsyncadd [#allocation4], %s439
      %s442 = sshll.u32 [#allocation5], 4
      %s443 = int_to_ptr.vmem [resolvable:$true] %s442
      %445 = dma.vmem_to_hbm [thread:$0]  %s443, 128, %s2, [#allocation4]
    $region17: #{tpu_custom_call.1} parent=1 // pred_fallthru
      _
    // Predicated region
    $region18: #{tpu_custom_call.1} parent=1 // pred_check
      _
    $region19: #{tpu_custom_call.1} parent=1 // pred_check_branch
      %447 = sbr.rel (0) target = $region21
    $region20: #{tpu_custom_call.1} parent=1 // pred_region
      %448 = dma.done [#allocation4], 128
    $region21: #{tpu_custom_call.1} parent=1 // pred_fallthru
      _
    %449 = vsyncpa [#allocation3], 1
    %450 = vsyncpa [#allocation4], 1

</llo_original>
